<compile_context>
chip_gen: v5e
topology: v5e:2x2
jax: 0.10.0
libtpu: 0.0.40
codegen_flags: <defaults>
</compile_context>

<pallas_src>
import jax
import jax.numpy as jnp
import numpy as np
from jax.experimental import pallas as pl
from jax.experimental.pallas import tpu as pltpu

HIDDEN = 64
INPUT = 5


# ---------------------------------------------------------------------------
# Fused kernel: unrolled LSTM recurrence -> graph attention -> prediction.
# Working set is a few hundred KB, everything lives in vregs / VMEM.
# ---------------------------------------------------------------------------
def relation_lstm_kernel(gates_x_ref, whh_cols_ref, rel_resid_ref, pred_ref):
    # gates_x: (T, B, 4H) = x_t @ W_ih_scaled + b_scaled (precomputed in wrapper)
    # whh_cols: (H, 4H+3) = [W_hh_scaled | w_head | w_fc_h | w_fc_g]
    # rel_resid: (B, B+1) = [rel_mask + rel_w + b_rel | residual-fc contribution]
    T, B, G = gates_x_ref.shape
    H = G // 4
    w_hh = whh_cols_ref[:, :G]                                  # (H, 4H), loaded once

    # ---- LSTM recurrence, fully unrolled (T static) ------------------------
    h = jnp.zeros((B, H), jnp.float32)
    c = jnp.zeros((B, H), jnp.float32)
    for t in range(T):
        gates = gates_x_ref[t] + jnp.dot(h, w_hh, preferred_element_type=jnp.float32)
        th = jnp.tanh(gates)                    # one EUP pass over the whole gate tile
        i_f = 0.5 * th[:, :2 * H] + 0.5         # sigmoid(x) == 0.5*tanh(x/2) + 0.5
        i = i_f[:, :H]
        f = i_f[:, H:]
        g = th[:, 2 * H:3 * H]
        o = 0.5 * th[:, 3 * H:] + 0.5
        c = f * c + i * g
        h = o * jnp.tanh(c)

    # ---- collapsed attention / fc epilogue ---------------------------------
    # Single (B,3) matmul instead of three N=1 matmuls.
    hv = jnp.dot(h, whh_cols_ref[:, G:], preferred_element_type=jnp.float32)
    head = hv[:, 0:1]        # h @ w_head
    fc_h = hv[:, 1:2]        # h @ w_fc[5:69]
    fc_g = hv[:, 2:3]        # h @ w_fc[69:133]

    # logits[i,j] = rel_mask + rel_w + b_rel + head[i]
    # (tail[j], b_tail, b_head are constant along axis 0 -> cancel under softmax)
    logits = rel_resid_ref[:, :B] + head
    m = jnp.max(logits, axis=0, keepdims=True)
    e = jnp.exp(logits - m)
    s = jnp.sum(e, axis=0, keepdims=True)
    attn = e * pl.reciprocal(s, approx=True)
    # TODO(synk): nn.Dropout(p=0.0) is identity, so it is omitted here.

    # (attn @ h) @ w_fc_g == attn @ (h @ w_fc_g): never materialize g_out / concat
    g_contrib = jnp.dot(attn, fc_g, preferred_element_type=jnp.float32)   # (B, 1)

    # residual-fc contribution (incl. b_fc) was folded in the wrapper -> last column
    pred_ref[...] = rel_resid_ref[:, B:B + 1] + fc_h + g_contrib


# ---------------------------------------------------------------------------
# One-time parameter preparation (runs outside jit, once per model)
# ---------------------------------------------------------------------------
def prepare_params(p):
    B = p["rel_mask"].shape[0]
    H, I = HIDDEN, INPUT
    K = p["rel_enc"].shape[-1]

    # Pre-scale i/f/o gate columns by 0.5 so the kernel uses one tanh per step.
    scale = jnp.concatenate([jnp.full((2 * H,), 0.5, jnp.float32),
                             jnp.ones((H,), jnp.float32),
                             jnp.full((H,), 0.5, jnp.float32)])[None, :]
    w_ih_s = p["w_ih"] * scale
    b_s = p["b_lstm"] * scale

    w_fc_res = p["w_fc"][:I]            # (5, 1)
    w_fc_h = p["w_fc"][I:I + H]         # (64, 1)
    w_fc_g = p["w_fc"][I + H:]          # (64, 1)

    # Pack W_hh (scaled) with the three h-side column vectors into one slab.
    whh_cols = jnp.concatenate([p["w_hh"] * scale, p["w_head"], w_fc_h, w_fc_g],
                               axis=1)                                     # (H, 4H+3)

    # Fixed relation term + mask (softmax-invariant scalar biases dropped).
    rel_base = ((p["rel_enc"].reshape(B * B, K) @ p["w_rel"]).reshape(B, B)
                + p["b_rel"] + p["rel_mask"])                              # (B, B)

    # Fold fc_residual through the final fc (exact: no nonlinearity between them).
    w_res_fc = p["w_res"] @ w_fc_res                                       # (5, 1)
    resid_bias = p["b_res"] @ w_fc_res + p["b_fc"]                         # (1, 1)

    return {"w_ih_s": w_ih_s, "b_s": b_s, "whh_cols": whh_cols,
            "rel_base": rel_base, "w_res_fc": w_res_fc, "resid_bias": resid_bias}


# ---------------------------------------------------------------------------
# Per-call wrapper
# ---------------------------------------------------------------------------
@jax.jit
def relation_lstm_forward(x, prep):
    B, T, _ = x.shape

    # Input projection hoisted out of the recurrence; the einsum also absorbs
    # the (B,T,I) -> (T,B,4H) time-major transpose.
    gates_x = jnp.einsum("bti,ig->tbg", x, prep["w_ih_s"]) + prep["b_s"]

    # Folded residual-fc contribution (includes b_fc), packed next to rel_base.
    resid = x[:, -1, :] @ prep["w_res_fc"] + prep["resid_bias"]            # (B, 1)
    rel_resid = jnp.concatenate([prep["rel_base"], resid], axis=1)         # (B, B+1)

    vmem = pl.BlockSpec(memory_space=pltpu.MemorySpace.VMEM)
    pred = pl.pallas_call(
        relation_lstm_kernel,
        out_shape=jax.ShapeDtypeStruct((B, 1), jnp.float32),
        in_specs=[vmem, vmem, vmem],      # gates_x, whh_cols, rel_resid (3 DMAs)
        out_specs=vmem,
    )(gates_x, prep["whh_cols"], rel_resid)
    return pred


# ---------------------------------------------------------------------------
# Pure-JAX reference (mirrors the PyTorch forward exactly, biases included)
# ---------------------------------------------------------------------------
def reference_forward(x, p):
    B, T, _ = x.shape
    H = HIDDEN
    h = jnp.zeros((B, H), jnp.float32)
    c = jnp.zeros((B, H), jnp.float32)
    for t in range(T):
        gates = x[:, t, :] @ p["w_ih"] + h @ p["w_hh"] + p["b_lstm"]
        i = jax.nn.sigmoid(gates[:, :H])
        f = jax.nn.sigmoid(gates[:, H:2 * H])
        g = jnp.tanh(gates[:, 2 * H:3 * H])
        o = jax.nn.sigmoid(gates[:, 3 * H:4 * H])
        c = f * c + i * g
        h = o * jnp.tanh(c)

    K = p["rel_enc"].shape[-1]
    rel_w = (p["rel_enc"].reshape(B * B, K) @ p["w_rel"] + p["b_rel"]).reshape(B, B)
    head = h @ p["w_head"] + p["b_head"]                                # (B, 1)
    tail = h @ p["w_tail"] + p["b_tail"]                                # (B, 1)
    ones = jnp.ones((B, 1), jnp.float32)
    weight = head @ ones.T + ones @ tail.T + rel_w
    attn = jax.nn.softmax(p["rel_mask"] + weight, axis=0)
    g_out = attn @ h
    residual = x[:, -1, :] @ p["w_res"] + p["b_res"]
    cat = jnp.concatenate([residual, h, g_out], axis=1)
    return cat @ p["w_fc"] + p["b_fc"]


if __name__ == "__main__":
    B, T, K = 8, 8, 4
    key = jax.random.PRNGKey(0)
    ks = jax.random.split(key, 16)

    def u(k, shape, fan_in):
        s = 1.0 / np.sqrt(fan_in)
        return jax.random.uniform(k, shape, jnp.float32, -s, s)

    p = {
        # nn.LSTM(5, 64): weights stored pre-transposed as (in, 4H); b = b_ih + b_hh
        "w_ih": u(ks[0], (INPUT, 4 * HIDDEN), HIDDEN),
        "w_hh": u(ks[1], (HIDDEN, 4 * HIDDEN), HIDDEN),
        "b_lstm": u(ks[2], (1, 4 * HIDDEN), HIDDEN),
        # GraphModule
        "w_rel": u(ks[3], (K, 1), K),
        "b_rel": u(ks[4], (1,), K),
        "w_head": u(ks[5], (HIDDEN, 1), HIDDEN),
        "b_head": u(ks[6], (1,), HIDDEN),
        "w_tail": u(ks[7], (HIDDEN, 1), HIDDEN),
        "b_tail": u(ks[8], (1,), HIDDEN),
        # fc_residual(5, 5) and fc(133, 1)
        "w_res": u(ks[9], (INPUT, INPUT), INPUT),
        "b_res": u(ks[10], (1, INPUT), INPUT),
        "w_fc": u(ks[11], (2 * HIDDEN + INPUT, 1), 2 * HIDDEN + INPUT),
        "b_fc": u(ks[12], (1,), 2 * HIDDEN + INPUT),
        # fixed (non-trainable) relation encoding / mask
        "rel_enc": jax.random.normal(ks[13], (B, B, K), jnp.float32),
    }
    mask_bits = (jax.random.uniform(ks[14], (B, B)) < 0.7) | jnp.eye(B, dtype=bool)
    p["rel_mask"] = jnp.where(mask_bits, 0.0, -1e9).astype(jnp.float32)

    x = jax.random.normal(ks[15], (B, T, INPUT), jnp.float32)

    prep = jax.tree_util.tree_map(jax.block_until_ready, prepare_params(p))

    pred = jax.block_until_ready(relation_lstm_forward(x, prep))
    ref = jax.block_until_ready(reference_forward(x, p))
    assert pred.shape == (B, 1), pred.shape
    np.testing.assert_allclose(np.asarray(pred), np.asarray(ref), rtol=2e-3, atol=2e-3)
    print("KERNEL_OK")
</pallas_src>

<mosaic_0001>
module attributes {stable_mosaic.version = 11 : i64} {
  func.func @relation_lstm_kernel(%arg0: memref<8x8x256xf32, #tpu.memory_space<vmem>>, %arg1: memref<64x259xf32, #tpu.memory_space<vmem>>, %arg2: memref<8x9xf32, #tpu.memory_space<vmem>>, %arg3: memref<8x1xf32, #tpu.memory_space<vmem>>) attributes {dimension_semantics = [], scalar_prefetch = 0 : i64, scratch_operands = 0 : i64, tpu.core_type = #tpu.core_type<tc>} {
    %c0 = arith.constant 0 : index
    %c0_0 = arith.constant 0 : index
    %0 = vector.load %arg1[%c0, %c0_0] : memref<64x259xf32, #tpu.memory_space<vmem>>, vector<64x256xf32>
    %cst = arith.constant 0.000000e+00 : f32
    %1 = vector.broadcast %cst : f32 to vector<8x64xf32>
    %cst_1 = arith.constant 0.000000e+00 : f32
    %2 = vector.broadcast %cst_1 : f32 to vector<8x64xf32>
    %c0_2 = arith.constant 0 : index
    %c0_3 = arith.constant 0 : index
    %c0_4 = arith.constant 0 : index
    %3 = vector.load %arg0[%c0_2, %c0_3, %c0_4] : memref<8x8x256xf32, #tpu.memory_space<vmem>>, vector<1x8x256xf32>
    %4 = vector.shape_cast %3 : vector<1x8x256xf32> to vector<8x256xf32>
    %cst_5 = arith.constant dense<0.000000e+00> : vector<8x256xf32>
    %5 = tpu.matmul %1, %0, %cst_5 {dimension_numbers = #tpu.dot_dimension_numbers<[1], [0], [0], [1], [0, 0, 1, 1], [], []>} : vector<8x64xf32>, vector<64x256xf32>, vector<8x256xf32> -> vector<8x256xf32>
    %6 = arith.addf %4, %5 : vector<8x256xf32>
    %7 = math.tanh %6 : vector<8x256xf32>
    %8 = vector.extract_strided_slice %7 {offsets = [0, 0], sizes = [8, 128], strides = [1, 1]} : vector<8x256xf32> to vector<8x128xf32>
    %cst_6 = arith.constant 5.000000e-01 : f32
    %9 = vector.broadcast %cst_6 : f32 to vector<8x128xf32>
    %10 = arith.mulf %9, %8 : vector<8x128xf32>
    %cst_7 = arith.constant 5.000000e-01 : f32
    %11 = vector.broadcast %cst_7 : f32 to vector<8x128xf32>
    %12 = arith.addf %10, %11 : vector<8x128xf32>
    %13 = vector.extract_strided_slice %12 {offsets = [0, 0], sizes = [8, 64], strides = [1, 1]} : vector<8x128xf32> to vector<8x64xf32>
    %14 = vector.extract_strided_slice %12 {offsets = [0, 64], sizes = [8, 64], strides = [1, 1]} : vector<8x128xf32> to vector<8x64xf32>
    %15 = vector.extract_strided_slice %7 {offsets = [0, 128], sizes = [8, 64], strides = [1, 1]} : vector<8x256xf32> to vector<8x64xf32>
    %16 = vector.extract_strided_slice %7 {offsets = [0, 192], sizes = [8, 64], strides = [1, 1]} : vector<8x256xf32> to vector<8x64xf32>
    %cst_8 = arith.constant 5.000000e-01 : f32
    %17 = vector.broadcast %cst_8 : f32 to vector<8x64xf32>
    %18 = arith.mulf %17, %16 : vector<8x64xf32>
    %cst_9 = arith.constant 5.000000e-01 : f32
    %19 = vector.broadcast %cst_9 : f32 to vector<8x64xf32>
    %20 = arith.addf %18, %19 : vector<8x64xf32>
    %21 = arith.mulf %14, %2 : vector<8x64xf32>
    %22 = arith.mulf %13, %15 : vector<8x64xf32>
    %23 = arith.addf %21, %22 : vector<8x64xf32>
    %24 = math.tanh %23 : vector<8x64xf32>
    %25 = arith.mulf %20, %24 : vector<8x64xf32>
    %c1 = arith.constant 1 : index
    %c0_10 = arith.constant 0 : index
    %c0_11 = arith.constant 0 : index
    %26 = vector.load %arg0[%c1, %c0_10, %c0_11] : memref<8x8x256xf32, #tpu.memory_space<vmem>>, vector<1x8x256xf32>
    %27 = vector.shape_cast %26 : vector<1x8x256xf32> to vector<8x256xf32>
    %cst_12 = arith.constant dense<0.000000e+00> : vector<8x256xf32>
    %28 = tpu.matmul %25, %0, %cst_12 {dimension_numbers = #tpu.dot_dimension_numbers<[1], [0], [0], [1], [0, 0, 1, 1], [], []>} : vector<8x64xf32>, vector<64x256xf32>, vector<8x256xf32> -> vector<8x256xf32>
    %29 = arith.addf %27, %28 : vector<8x256xf32>
    %30 = math.tanh %29 : vector<8x256xf32>
    %31 = vector.extract_strided_slice %30 {offsets = [0, 0], sizes = [8, 128], strides = [1, 1]} : vector<8x256xf32> to vector<8x128xf32>
    %cst_13 = arith.constant 5.000000e-01 : f32
    %32 = vector.broadcast %cst_13 : f32 to vector<8x128xf32>
    %33 = arith.mulf %32, %31 : vector<8x128xf32>
    %cst_14 = arith.constant 5.000000e-01 : f32
    %34 = vector.broadcast %cst_14 : f32 to vector<8x128xf32>
    %35 = arith.addf %33, %34 : vector<8x128xf32>
    %36 = vector.extract_strided_slice %35 {offsets = [0, 0], sizes = [8, 64], strides = [1, 1]} : vector<8x128xf32> to vector<8x64xf32>
    %37 = vector.extract_strided_slice %35 {offsets = [0, 64], sizes = [8, 64], strides = [1, 1]} : vector<8x128xf32> to vector<8x64xf32>
    %38 = vector.extract_strided_slice %30 {offsets = [0, 128], sizes = [8, 64], strides = [1, 1]} : vector<8x256xf32> to vector<8x64xf32>
    %39 = vector.extract_strided_slice %30 {offsets = [0, 192], sizes = [8, 64], strides = [1, 1]} : vector<8x256xf32> to vector<8x64xf32>
    %cst_15 = arith.constant 5.000000e-01 : f32
    %40 = vector.broadcast %cst_15 : f32 to vector<8x64xf32>
    %41 = arith.mulf %40, %39 : vector<8x64xf32>
    %cst_16 = arith.constant 5.000000e-01 : f32
    %42 = vector.broadcast %cst_16 : f32 to vector<8x64xf32>
    %43 = arith.addf %41, %42 : vector<8x64xf32>
    %44 = arith.mulf %37, %23 : vector<8x64xf32>
    %45 = arith.mulf %36, %38 : vector<8x64xf32>
    %46 = arith.addf %44, %45 : vector<8x64xf32>
    %47 = math.tanh %46 : vector<8x64xf32>
    %48 = arith.mulf %43, %47 : vector<8x64xf32>
    %c2 = arith.constant 2 : index
    %c0_17 = arith.constant 0 : index
    %c0_18 = arith.constant 0 : index
    %49 = vector.load %arg0[%c2, %c0_17, %c0_18] : memref<8x8x256xf32, #tpu.memory_space<vmem>>, vector<1x8x256xf32>
    %50 = vector.shape_cast %49 : vector<1x8x256xf32> to vector<8x256xf32>
    %cst_19 = arith.constant dense<0.000000e+00> : vector<8x256xf32>
    %51 = tpu.matmul %48, %0, %cst_19 {dimension_numbers = #tpu.dot_dimension_numbers<[1], [0], [0], [1], [0, 0, 1, 1], [], []>} : vector<8x64xf32>, vector<64x256xf32>, vector<8x256xf32> -> vector<8x256xf32>
    %52 = arith.addf %50, %51 : vector<8x256xf32>
    %53 = math.tanh %52 : vector<8x256xf32>
    %54 = vector.extract_strided_slice %53 {offsets = [0, 0], sizes = [8, 128], strides = [1, 1]} : vector<8x256xf32> to vector<8x128xf32>
    %cst_20 = arith.constant 5.000000e-01 : f32
    %55 = vector.broadcast %cst_20 : f32 to vector<8x128xf32>
    %56 = arith.mulf %55, %54 : vector<8x128xf32>
    %cst_21 = arith.constant 5.000000e-01 : f32
    %57 = vector.broadcast %cst_21 : f32 to vector<8x128xf32>
    %58 = arith.addf %56, %57 : vector<8x128xf32>
    %59 = vector.extract_strided_slice %58 {offsets = [0, 0], sizes = [8, 64], strides = [1, 1]} : vector<8x128xf32> to vector<8x64xf32>
    %60 = vector.extract_strided_slice %58 {offsets = [0, 64], sizes = [8, 64], strides = [1, 1]} : vector<8x128xf32> to vector<8x64xf32>
    %61 = vector.extract_strided_slice %53 {offsets = [0, 128], sizes = [8, 64], strides = [1, 1]} : vector<8x256xf32> to vector<8x64xf32>
    %62 = vector.extract_strided_slice %53 {offsets = [0, 192], sizes = [8, 64], strides = [1, 1]} : vector<8x256xf32> to vector<8x64xf32>
    %cst_22 = arith.constant 5.000000e-01 : f32
    %63 = vector.broadcast %cst_22 : f32 to vector<8x64xf32>
    %64 = arith.mulf %63, %62 : vector<8x64xf32>
    %cst_23 = arith.constant 5.000000e-01 : f32
    %65 = vector.broadcast %cst_23 : f32 to vector<8x64xf32>
    %66 = arith.addf %64, %65 : vector<8x64xf32>
    %67 = arith.mulf %60, %46 : vector<8x64xf32>
    %68 = arith.mulf %59, %61 : vector<8x64xf32>
    %69 = arith.addf %67, %68 : vector<8x64xf32>
    %70 = math.tanh %69 : vector<8x64xf32>
    %71 = arith.mulf %66, %70 : vector<8x64xf32>
    %c3 = arith.constant 3 : index
    %c0_24 = arith.constant 0 : index
    %c0_25 = arith.constant 0 : index
    %72 = vector.load %arg0[%c3, %c0_24, %c0_25] : memref<8x8x256xf32, #tpu.memory_space<vmem>>, vector<1x8x256xf32>
    %73 = vector.shape_cast %72 : vector<1x8x256xf32> to vector<8x256xf32>
    %cst_26 = arith.constant dense<0.000000e+00> : vector<8x256xf32>
    %74 = tpu.matmul %71, %0, %cst_26 {dimension_numbers = #tpu.dot_dimension_numbers<[1], [0], [0], [1], [0, 0, 1, 1], [], []>} : vector<8x64xf32>, vector<64x256xf32>, vector<8x256xf32> -> vector<8x256xf32>
    %75 = arith.addf %73, %74 : vector<8x256xf32>
    %76 = math.tanh %75 : vector<8x256xf32>
    %77 = vector.extract_strided_slice %76 {offsets = [0, 0], sizes = [8, 128], strides = [1, 1]} : vector<8x256xf32> to vector<8x128xf32>
    %cst_27 = arith.constant 5.000000e-01 : f32
    %78 = vector.broadcast %cst_27 : f32 to vector<8x128xf32>
    %79 = arith.mulf %78, %77 : vector<8x128xf32>
    %cst_28 = arith.constant 5.000000e-01 : f32
    %80 = vector.broadcast %cst_28 : f32 to vector<8x128xf32>
    %81 = arith.addf %79, %80 : vector<8x128xf32>
    %82 = vector.extract_strided_slice %81 {offsets = [0, 0], sizes = [8, 64], strides = [1, 1]} : vector<8x128xf32> to vector<8x64xf32>
    %83 = vector.extract_strided_slice %81 {offsets = [0, 64], sizes = [8, 64], strides = [1, 1]} : vector<8x128xf32> to vector<8x64xf32>
    %84 = vector.extract_strided_slice %76 {offsets = [0, 128], sizes = [8, 64], strides = [1, 1]} : vector<8x256xf32> to vector<8x64xf32>
    %85 = vector.extract_strided_slice %76 {offsets = [0, 192], sizes = [8, 64], strides = [1, 1]} : vector<8x256xf32> to vector<8x64xf32>
    %cst_29 = arith.constant 5.000000e-01 : f32
    %86 = vector.broadcast %cst_29 : f32 to vector<8x64xf32>
    %87 = arith.mulf %86, %85 : vector<8x64xf32>
    %cst_30 = arith.constant 5.000000e-01 : f32
    %88 = vector.broadcast %cst_30 : f32 to vector<8x64xf32>
    %89 = arith.addf %87, %88 : vector<8x64xf32>
    %90 = arith.mulf %83, %69 : vector<8x64xf32>
    %91 = arith.mulf %82, %84 : vector<8x64xf32>
    %92 = arith.addf %90, %91 : vector<8x64xf32>
    %93 = math.tanh %92 : vector<8x64xf32>
    %94 = arith.mulf %89, %93 : vector<8x64xf32>
    %c4 = arith.constant 4 : index
    %c0_31 = arith.constant 0 : index
    %c0_32 = arith.constant 0 : index
    %95 = vector.load %arg0[%c4, %c0_31, %c0_32] : memref<8x8x256xf32, #tpu.memory_space<vmem>>, vector<1x8x256xf32>
    %96 = vector.shape_cast %95 : vector<1x8x256xf32> to vector<8x256xf32>
    %cst_33 = arith.constant dense<0.000000e+00> : vector<8x256xf32>
    %97 = tpu.matmul %94, %0, %cst_33 {dimension_numbers = #tpu.dot_dimension_numbers<[1], [0], [0], [1], [0, 0, 1, 1], [], []>} : vector<8x64xf32>, vector<64x256xf32>, vector<8x256xf32> -> vector<8x256xf32>
    %98 = arith.addf %96, %97 : vector<8x256xf32>
    %99 = math.tanh %98 : vector<8x256xf32>
    %100 = vector.extract_strided_slice %99 {offsets = [0, 0], sizes = [8, 128], strides = [1, 1]} : vector<8x256xf32> to vector<8x128xf32>
    %cst_34 = arith.constant 5.000000e-01 : f32
    %101 = vector.broadcast %cst_34 : f32 to vector<8x128xf32>
    %102 = arith.mulf %101, %100 : vector<8x128xf32>
    %cst_35 = arith.constant 5.000000e-01 : f32
    %103 = vector.broadcast %cst_35 : f32 to vector<8x128xf32>
    %104 = arith.addf %102, %103 : vector<8x128xf32>
    %105 = vector.extract_strided_slice %104 {offsets = [0, 0], sizes = [8, 64], strides = [1, 1]} : vector<8x128xf32> to vector<8x64xf32>
    %106 = vector.extract_strided_slice %104 {offsets = [0, 64], sizes = [8, 64], strides = [1, 1]} : vector<8x128xf32> to vector<8x64xf32>
    %107 = vector.extract_strided_slice %99 {offsets = [0, 128], sizes = [8, 64], strides = [1, 1]} : vector<8x256xf32> to vector<8x64xf32>
    %108 = vector.extract_strided_slice %99 {offsets = [0, 192], sizes = [8, 64], strides = [1, 1]} : vector<8x256xf32> to vector<8x64xf32>
    %cst_36 = arith.constant 5.000000e-01 : f32
    %109 = vector.broadcast %cst_36 : f32 to vector<8x64xf32>
    %110 = arith.mulf %109, %108 : vector<8x64xf32>
    %cst_37 = arith.constant 5.000000e-01 : f32
    %111 = vector.broadcast %cst_37 : f32 to vector<8x64xf32>
    %112 = arith.addf %110, %111 : vector<8x64xf32>
    %113 = arith.mulf %106, %92 : vector<8x64xf32>
    %114 = arith.mulf %105, %107 : vector<8x64xf32>
    %115 = arith.addf %113, %114 : vector<8x64xf32>
    %116 = math.tanh %115 : vector<8x64xf32>
    %117 = arith.mulf %112, %116 : vector<8x64xf32>
    %c5 = arith.constant 5 : index
    %c0_38 = arith.constant 0 : index
    %c0_39 = arith.constant 0 : index
    %118 = vector.load %arg0[%c5, %c0_38, %c0_39] : memref<8x8x256xf32, #tpu.memory_space<vmem>>, vector<1x8x256xf32>
    %119 = vector.shape_cast %118 : vector<1x8x256xf32> to vector<8x256xf32>
    %cst_40 = arith.constant dense<0.000000e+00> : vector<8x256xf32>
    %120 = tpu.matmul %117, %0, %cst_40 {dimension_numbers = #tpu.dot_dimension_numbers<[1], [0], [0], [1], [0, 0, 1, 1], [], []>} : vector<8x64xf32>, vector<64x256xf32>, vector<8x256xf32> -> vector<8x256xf32>
    %121 = arith.addf %119, %120 : vector<8x256xf32>
    %122 = math.tanh %121 : vector<8x256xf32>
    %123 = vector.extract_strided_slice %122 {offsets = [0, 0], sizes = [8, 128], strides = [1, 1]} : vector<8x256xf32> to vector<8x128xf32>
    %cst_41 = arith.constant 5.000000e-01 : f32
    %124 = vector.broadcast %cst_41 : f32 to vector<8x128xf32>
    %125 = arith.mulf %124, %123 : vector<8x128xf32>
    %cst_42 = arith.constant 5.000000e-01 : f32
    %126 = vector.broadcast %cst_42 : f32 to vector<8x128xf32>
    %127 = arith.addf %125, %126 : vector<8x128xf32>
    %128 = vector.extract_strided_slice %127 {offsets = [0, 0], sizes = [8, 64], strides = [1, 1]} : vector<8x128xf32> to vector<8x64xf32>
    %129 = vector.extract_strided_slice %127 {offsets = [0, 64], sizes = [8, 64], strides = [1, 1]} : vector<8x128xf32> to vector<8x64xf32>
    %130 = vector.extract_strided_slice %122 {offsets = [0, 128], sizes = [8, 64], strides = [1, 1]} : vector<8x256xf32> to vector<8x64xf32>
    %131 = vector.extract_strided_slice %122 {offsets = [0, 192], sizes = [8, 64], strides = [1, 1]} : vector<8x256xf32> to vector<8x64xf32>
    %cst_43 = arith.constant 5.000000e-01 : f32
    %132 = vector.broadcast %cst_43 : f32 to vector<8x64xf32>
    %133 = arith.mulf %132, %131 : vector<8x64xf32>
    %cst_44 = arith.constant 5.000000e-01 : f32
    %134 = vector.broadcast %cst_44 : f32 to vector<8x64xf32>
    %135 = arith.addf %133, %134 : vector<8x64xf32>
    %136 = arith.mulf %129, %115 : vector<8x64xf32>
    %137 = arith.mulf %128, %130 : vector<8x64xf32>
    %138 = arith.addf %136, %137 : vector<8x64xf32>
    %139 = math.tanh %138 : vector<8x64xf32>
    %140 = arith.mulf %135, %139 : vector<8x64xf32>
    %c6 = arith.constant 6 : index
    %c0_45 = arith.constant 0 : index
    %c0_46 = arith.constant 0 : index
    %141 = vector.load %arg0[%c6, %c0_45, %c0_46] : memref<8x8x256xf32, #tpu.memory_space<vmem>>, vector<1x8x256xf32>
    %142 = vector.shape_cast %141 : vector<1x8x256xf32> to vector<8x256xf32>
    %cst_47 = arith.constant dense<0.000000e+00> : vector<8x256xf32>
    %143 = tpu.matmul %140, %0, %cst_47 {dimension_numbers = #tpu.dot_dimension_numbers<[1], [0], [0], [1], [0, 0, 1, 1], [], []>} : vector<8x64xf32>, vector<64x256xf32>, vector<8x256xf32> -> vector<8x256xf32>
    %144 = arith.addf %142, %143 : vector<8x256xf32>
    %145 = math.tanh %144 : vector<8x256xf32>
    %146 = vector.extract_strided_slice %145 {offsets = [0, 0], sizes = [8, 128], strides = [1, 1]} : vector<8x256xf32> to vector<8x128xf32>
    %cst_48 = arith.constant 5.000000e-01 : f32
    %147 = vector.broadcast %cst_48 : f32 to vector<8x128xf32>
    %148 = arith.mulf %147, %146 : vector<8x128xf32>
    %cst_49 = arith.constant 5.000000e-01 : f32
    %149 = vector.broadcast %cst_49 : f32 to vector<8x128xf32>
    %150 = arith.addf %148, %149 : vector<8x128xf32>
    %151 = vector.extract_strided_slice %150 {offsets = [0, 0], sizes = [8, 64], strides = [1, 1]} : vector<8x128xf32> to vector<8x64xf32>
    %152 = vector.extract_strided_slice %150 {offsets = [0, 64], sizes = [8, 64], strides = [1, 1]} : vector<8x128xf32> to vector<8x64xf32>
    %153 = vector.extract_strided_slice %145 {offsets = [0, 128], sizes = [8, 64], strides = [1, 1]} : vector<8x256xf32> to vector<8x64xf32>
    %154 = vector.extract_strided_slice %145 {offsets = [0, 192], sizes = [8, 64], strides = [1, 1]} : vector<8x256xf32> to vector<8x64xf32>
    %cst_50 = arith.constant 5.000000e-01 : f32
    %155 = vector.broadcast %cst_50 : f32 to vector<8x64xf32>
    %156 = arith.mulf %155, %154 : vector<8x64xf32>
    %cst_51 = arith.constant 5.000000e-01 : f32
    %157 = vector.broadcast %cst_51 : f32 to vector<8x64xf32>
    %158 = arith.addf %156, %157 : vector<8x64xf32>
    %159 = arith.mulf %152, %138 : vector<8x64xf32>
    %160 = arith.mulf %151, %153 : vector<8x64xf32>
    %161 = arith.addf %159, %160 : vector<8x64xf32>
    %162 = math.tanh %161 : vector<8x64xf32>
    %163 = arith.mulf %158, %162 : vector<8x64xf32>
    %c7 = arith.constant 7 : index
    %c0_52 = arith.constant 0 : index
    %c0_53 = arith.constant 0 : index
    %164 = vector.load %arg0[%c7, %c0_52, %c0_53] : memref<8x8x256xf32, #tpu.memory_space<vmem>>, vector<1x8x256xf32>
    %165 = vector.shape_cast %164 : vector<1x8x256xf32> to vector<8x256xf32>
    %cst_54 = arith.constant dense<0.000000e+00> : vector<8x256xf32>
    %166 = tpu.matmul %163, %0, %cst_54 {dimension_numbers = #tpu.dot_dimension_numbers<[1], [0], [0], [1], [0, 0, 1, 1], [], []>} : vector<8x64xf32>, vector<64x256xf32>, vector<8x256xf32> -> vector<8x256xf32>
    %167 = arith.addf %165, %166 : vector<8x256xf32>
    %168 = math.tanh %167 : vector<8x256xf32>
    %169 = vector.extract_strided_slice %168 {offsets = [0, 0], sizes = [8, 128], strides = [1, 1]} : vector<8x256xf32> to vector<8x128xf32>
    %cst_55 = arith.constant 5.000000e-01 : f32
    %170 = vector.broadcast %cst_55 : f32 to vector<8x128xf32>
    %171 = arith.mulf %170, %169 : vector<8x128xf32>
    %cst_56 = arith.constant 5.000000e-01 : f32
    %172 = vector.broadcast %cst_56 : f32 to vector<8x128xf32>
    %173 = arith.addf %171, %172 : vector<8x128xf32>
    %174 = vector.extract_strided_slice %173 {offsets = [0, 0], sizes = [8, 64], strides = [1, 1]} : vector<8x128xf32> to vector<8x64xf32>
    %175 = vector.extract_strided_slice %173 {offsets = [0, 64], sizes = [8, 64], strides = [1, 1]} : vector<8x128xf32> to vector<8x64xf32>
    %176 = vector.extract_strided_slice %168 {offsets = [0, 128], sizes = [8, 64], strides = [1, 1]} : vector<8x256xf32> to vector<8x64xf32>
    %177 = vector.extract_strided_slice %168 {offsets = [0, 192], sizes = [8, 64], strides = [1, 1]} : vector<8x256xf32> to vector<8x64xf32>
    %cst_57 = arith.constant 5.000000e-01 : f32
    %178 = vector.broadcast %cst_57 : f32 to vector<8x64xf32>
    %179 = arith.mulf %178, %177 : vector<8x64xf32>
    %cst_58 = arith.constant 5.000000e-01 : f32
    %180 = vector.broadcast %cst_58 : f32 to vector<8x64xf32>
    %181 = arith.addf %179, %180 : vector<8x64xf32>
    %182 = arith.mulf %175, %161 : vector<8x64xf32>
    %183 = arith.mulf %174, %176 : vector<8x64xf32>
    %184 = arith.addf %182, %183 : vector<8x64xf32>
    %185 = math.tanh %184 : vector<8x64xf32>
    %186 = arith.mulf %181, %185 : vector<8x64xf32>
    %c0_59 = arith.constant 0 : index
    %c256 = arith.constant 256 : index
    %187 = vector.load %arg1[%c0_59, %c256] : memref<64x259xf32, #tpu.memory_space<vmem>>, vector<64x3xf32>
    %cst_60 = arith.constant dense<0.000000e+00> : vector<8x3xf32>
    %188 = tpu.matmul %186, %187, %cst_60 {dimension_numbers = #tpu.dot_dimension_numbers<[1], [0], [0], [1], [0, 0, 1, 1], [], []>} : vector<8x64xf32>, vector<64x3xf32>, vector<8x3xf32> -> vector<8x3xf32>
    %189 = vector.extract_strided_slice %188 {offsets = [0, 0], sizes = [8, 1], strides = [1, 1]} : vector<8x3xf32> to vector<8x1xf32>
    %190 = vector.extract_strided_slice %188 {offsets = [0, 1], sizes = [8, 1], strides = [1, 1]} : vector<8x3xf32> to vector<8x1xf32>
    %191 = vector.extract_strided_slice %188 {offsets = [0, 2], sizes = [8, 1], strides = [1, 1]} : vector<8x3xf32> to vector<8x1xf32>
    %c0_61 = arith.constant 0 : index
    %c0_62 = arith.constant 0 : index
    %192 = vector.load %arg2[%c0_61, %c0_62] : memref<8x9xf32, #tpu.memory_space<vmem>>, vector<8x8xf32>
    %193 = vector.broadcast %189 : vector<8x1xf32> to vector<8x8xf32>
    %194 = arith.addf %192, %193 : vector<8x8xf32>
    %cst_63 = arith.constant dense<0xFF800000> : vector<8xf32>
    %195 = vector.multi_reduction <maximumf>, %194, %cst_63 [0] : vector<8x8xf32> to vector<8xf32>
    %196 = vector.shape_cast %195 : vector<8xf32> to vector<1x8xf32>
    %197 = vector.broadcast %196 : vector<1x8xf32> to vector<8x8xf32>
    %198 = arith.subf %194, %197 : vector<8x8xf32>
    %199 = math.exp %198 : vector<8x8xf32>
    %cst_64 = arith.constant dense<0.000000e+00> : vector<8xf32>
    %200 = vector.multi_reduction <add>, %199, %cst_64 [0] : vector<8x8xf32> to vector<8xf32>
    %201 = vector.shape_cast %200 : vector<8xf32> to vector<1x8xf32>
    %202 = tpu.reciprocal %201 {approx = true} : vector<1x8xf32> -> vector<1x8xf32>
    %203 = vector.broadcast %202 : vector<1x8xf32> to vector<8x8xf32>
    %204 = arith.mulf %199, %203 : vector<8x8xf32>
    %cst_65 = arith.constant dense<0.000000e+00> : vector<8x1xf32>
    %205 = tpu.matmul %204, %191, %cst_65 {dimension_numbers = #tpu.dot_dimension_numbers<[1], [0], [0], [1], [0, 0, 1, 1], [], []>} : vector<8x8xf32>, vector<8x1xf32>, vector<8x1xf32> -> vector<8x1xf32>
    %c0_66 = arith.constant 0 : index
    %c8 = arith.constant 8 : index
    %206 = vector.load %arg2[%c0_66, %c8] : memref<8x9xf32, #tpu.memory_space<vmem>>, vector<8x1xf32>
    %207 = arith.addf %206, %190 : vector<8x1xf32>
    %208 = arith.addf %207, %205 : vector<8x1xf32>
    %c0_67 = arith.constant 0 : index
    %c0_68 = arith.constant 0 : index
    %209 = vector.load %arg3[%c0_67, %c0_68] : memref<8x1xf32, #tpu.memory_space<vmem>>, vector<8x1xf32>
    tpu.vector_store %arg3[%c0_67, %c0_68], %208 {strides = array<i32>} : memref<8x1xf32, #tpu.memory_space<vmem>>, vector<8x1xf32>,
    return
  }
}

</mosaic_0001>

<llo_original>
// kernel: relation_lstm_forward.1
$region0: #{relation_lstm_forward.1}
  #allocation0 [shape = 'u32[]', space=smem, size = 0x4, offset = 0x4, fixed_abs, tag = 'smem constant byte address 0x4 - core index']
  #allocation1 [shape = 'u32[72,128]{1,0:T(1,128)}', space=vmem, size = 0x9000, scoped, tag = 'internal scratch']
  %s0 = inlined_call_operand.vmem [shape: f32[8,8,256], index: 0, kind: input, shape index: {}]
  %s1 = inlined_call_operand.vmem [shape: f32[64,259], index: 1, kind: input, shape index: {}]
  %s2 = inlined_call_operand.vmem [shape: f32[8,9], index: 2, kind: input, shape index: {}]
  %s3 = inlined_call_operand.vmem [shape: f32[8,1], index: 3, kind: output, shape index: {}]
  %s4 = sld [smem:[#allocation0]]
  $region22: #{relation_lstm_forward.1} parent=0
    _
  %s6 = ssub.s32 1, %s4
  %s7 = scalar_select 0, %s6, %s4
  // Predicated region
  $region2: #{relation_lstm_forward.1} parent=0 // pred_check
    _
  $region3: #{relation_lstm_forward.1} parent=0 // pred_check_branch
    %9 = sbr.rel (0) target = $region5
  $region4: #{relation_lstm_forward.1} parent=0 // pred_region
    _
  $region5: #{relation_lstm_forward.1} parent=0 // pred_fallthru
    _
  // Predicated region
  $region6: #{relation_lstm_forward.1} parent=0 // pred_check
    _
  $region7: #{relation_lstm_forward.1} parent=0 // pred_check_branch
    %11 = sbr.rel (0) target = $region9
  $region8: #{relation_lstm_forward.1} parent=0 // pred_region
    _
  $region9: #{relation_lstm_forward.1} parent=0 // pred_fallthru
    _
  // Predicated region
  $region10: #{relation_lstm_forward.1} parent=0 // pred_check
    _
  $region11: #{relation_lstm_forward.1} parent=0 // pred_check_branch
    %13 = sbr.rel (0) target = $region13
  $region12: #{relation_lstm_forward.1} parent=0 // pred_region
    _
  $region13: #{relation_lstm_forward.1} parent=0 // pred_fallthru
    _
  %v14 = vld [vmem:[%s1] sm:$0xff]
  %v15 = vld [vmem:[%s1 + $0x8] sm:$0xff]
  %v16 = vld [vmem:[%s1 + $0x18] sm:$0xff]
  %v17 = vld [vmem:[%s1 + $0x20] sm:$0xff]
  %v18 = vld [vmem:[%s1 + $0x30] sm:$0xff]
  %v19 = vld [vmem:[%s1 + $0x38] sm:$0xff]
  %v20 = vld [vmem:[%s1 + $0x48] sm:$0xff]
  %v21 = vld [vmem:[%s1 + $0x50] sm:$0xff]
  %v22 = vld [vmem:[%s1 + $0x60] sm:$0xff]
  %v23 = vld [vmem:[%s1 + $0x68] sm:$0xff]
  %v24 = vld [vmem:[%s1 + $0x78] sm:$0xff]
  %v25 = vld [vmem:[%s1 + $0x80] sm:$0xff]
  %v26 = vld [vmem:[%s1 + $0x90] sm:$0xff]
  %v27 = vld [vmem:[%s1 + $0x98] sm:$0xff]
  %v28 = vld [vmem:[%s1 + $0xa8] sm:$0xff]
  %v29 = vld [vmem:[%s1 + $0xb0] sm:$0xff]
  %v30 = vld [vmem:[%s0] sm:$0xff]
  %v31 = vld [vmem:[%s0 + $0x8] sm:$0xff]
  %vm32 = vcmask 523264
  %v34 = vsel %vm32, 0.0, 0
  %36 = vmatpush.msra.mxu0 0.0
  %37 = vmatpush.msra.mxu0 0.0
  %38 = vmatpush.msra.mxu0 0.0
  %39 = vmatpush.msra.mxu0 0.0
  %40 = vmatpush.msra.mxu0 0.0
  %41 = vmatpush.msra.mxu0 0.0
  %42 = vmatpush.msra.mxu0 0.0
  %43 = vmatpush.msra.mxu0 0.0
  %44 = vmatpush.msra.mxu0 %v28
  %45 = vmatpush.msra.mxu0 %v26
  %46 = vmatpush.msra.mxu0 %v24
  %47 = vmatpush.msra.mxu0 %v22
  %48 = vmatpush.msra.mxu0 %v20
  %49 = vmatpush.msra.mxu0 %v18
  %50 = vmatpush.msra.mxu0 %v16
  %51 = vmatpush.msra.mxu0 %v14
  %52 = vmatmul.f32.gmra.mxu0 %v34
  %v53 = vpop.f32.mrf.mxu0
  %v54 = vadd.f32 0.0, %v53
  %55 = vdwg.mxu0
  %56 = vmatpush.msra.mxu0 0.0
  %57 = vmatpush.msra.mxu0 0.0
  %58 = vmatpush.msra.mxu0 0.0
  %59 = vmatpush.msra.mxu0 0.0
  %60 = vmatpush.msra.mxu0 0.0
  %61 = vmatpush.msra.mxu0 0.0
  %62 = vmatpush.msra.mxu0 0.0
  %63 = vmatpush.msra.mxu0 0.0
  %64 = vmatpush.msra.mxu0 %v29
  %65 = vmatpush.msra.mxu0 %v27
  %66 = vmatpush.msra.mxu0 %v25
  %67 = vmatpush.msra.mxu0 %v23
  %68 = vmatpush.msra.mxu0 %v21
  %69 = vmatpush.msra.mxu0 %v19
  %70 = vmatpush.msra.mxu0 %v17
  %71 = vmatpush.msra.mxu0 %v15
  %72 = vmatmul.f32.gmra.mxu0 %v34
  %v73 = vpop.f32.mrf.mxu0
  %v74 = vadd.f32 0.0, %v73
  %75 = vdwg.mxu0
  %v76 = vadd.f32 %v30, %v54
  %v77 = vadd.f32 %v31, %v74
  %v78 = vtanh.pop %v76
  %v79 = vtanh.pop %v77
  %v80 = vmul.f32 %v78, 0.5
  %v81 = vadd.f32 %v80, 0.5
  %v82 = vmul.f32 %v79, 0.5
  %v83 = vadd.f32 %v82, 0.5
  %v84 = vmul.f32 %v81, 0.0
  %v85 = vmul.f32 %v81, %v79
  %87 = vrot.lane.b32.xlu0 %v85, 64
  %v88 = vpop.permute.xlu0 %87
  %v90 = vadd.f32 %v84, %v88
  %v91 = vtanh.pop %v90
  %v92 = vmul.f32 %v83, %v91
  %s93 = scalar_lea.vmem %s0, 16
  %v94 = vld [vmem:[%s93] sm:$0xff]
  %v95 = vld [vmem:[%s93 + $0x8] sm:$0xff]
  %97 = vrot.lane.b32.xlu0 %v92, 64
  %v98 = vpop.permute.xlu0 %97
  %v99 = vsel %vm32, %v98, 0
  %101 = vmatpush.msra.mxu0 0.0
  %102 = vmatpush.msra.mxu0 0.0
  %103 = vmatpush.msra.mxu0 0.0
  %104 = vmatpush.msra.mxu0 0.0
  %105 = vmatpush.msra.mxu0 0.0
  %106 = vmatpush.msra.mxu0 0.0
  %107 = vmatpush.msra.mxu0 0.0
  %108 = vmatpush.msra.mxu0 0.0
  %109 = vmatpush.msra.mxu0 %v28
  %110 = vmatpush.msra.mxu0 %v26
  %111 = vmatpush.msra.mxu0 %v24
  %112 = vmatpush.msra.mxu0 %v22
  %113 = vmatpush.msra.mxu0 %v20
  %114 = vmatpush.msra.mxu0 %v18
  %115 = vmatpush.msra.mxu0 %v16
  %116 = vmatpush.msra.mxu0 %v14
  %117 = vmatmul.f32.gmra.mxu0 %v99
  %v118 = vpop.f32.mrf.mxu0
  %v119 = vadd.f32 0.0, %v118
  %120 = vdwg.mxu0
  %121 = vmatpush.msra.mxu0 0.0
  %122 = vmatpush.msra.mxu0 0.0
  %123 = vmatpush.msra.mxu0 0.0
  %124 = vmatpush.msra.mxu0 0.0
  %125 = vmatpush.msra.mxu0 0.0
  %126 = vmatpush.msra.mxu0 0.0
  %127 = vmatpush.msra.mxu0 0.0
  %128 = vmatpush.msra.mxu0 0.0
  %129 = vmatpush.msra.mxu0 %v29
  %130 = vmatpush.msra.mxu0 %v27
  %131 = vmatpush.msra.mxu0 %v25
  %132 = vmatpush.msra.mxu0 %v23
  %133 = vmatpush.msra.mxu0 %v21
  %134 = vmatpush.msra.mxu0 %v19
  %135 = vmatpush.msra.mxu0 %v17
  %136 = vmatpush.msra.mxu0 %v15
  %137 = vmatmul.f32.gmra.mxu0 %v99
  %v138 = vpop.f32.mrf.mxu0
  %v139 = vadd.f32 0.0, %v138
  %140 = vdwg.mxu0
  %v141 = vadd.f32 %v94, %v119
  %v142 = vadd.f32 %v95, %v139
  %v143 = vtanh.pop %v141
  %v144 = vtanh.pop %v142
  %v145 = vmul.f32 %v143, 0.5
  %v146 = vadd.f32 %v145, 0.5
  %v147 = vmul.f32 %v144, 0.5
  %v148 = vadd.f32 %v147, 0.5
  %v149 = vmul.f32 %v146, %v90
  %v150 = vmul.f32 %v146, %v144
  %152 = vrot.lane.b32.xlu0 %v150, 64
  %v153 = vpop.permute.xlu0 %152
  %v155 = vadd.f32 %v149, %v153
  %v156 = vtanh.pop %v155
  %v157 = vmul.f32 %v148, %v156
  %s158 = scalar_lea.vmem %s0, 32
  %v159 = vld [vmem:[%s158] sm:$0xff]
  %v160 = vld [vmem:[%s158 + $0x8] sm:$0xff]
  %162 = vrot.lane.b32.xlu0 %v157, 64
  %v163 = vpop.permute.xlu0 %162
  %v164 = vsel %vm32, %v163, 0
  %166 = vmatpush.msra.mxu0 0.0
  %167 = vmatpush.msra.mxu0 0.0
  %168 = vmatpush.msra.mxu0 0.0
  %169 = vmatpush.msra.mxu0 0.0
  %170 = vmatpush.msra.mxu0 0.0
  %171 = vmatpush.msra.mxu0 0.0
  %172 = vmatpush.msra.mxu0 0.0
  %173 = vmatpush.msra.mxu0 0.0
  %174 = vmatpush.msra.mxu0 %v28
  %175 = vmatpush.msra.mxu0 %v26
  %176 = vmatpush.msra.mxu0 %v24
  %177 = vmatpush.msra.mxu0 %v22
  %178 = vmatpush.msra.mxu0 %v20
  %179 = vmatpush.msra.mxu0 %v18
  %180 = vmatpush.msra.mxu0 %v16
  %181 = vmatpush.msra.mxu0 %v14
  %182 = vmatmul.f32.gmra.mxu0 %v164
  %v183 = vpop.f32.mrf.mxu0
  %v184 = vadd.f32 0.0, %v183
  %185 = vdwg.mxu0
  %186 = vmatpush.msra.mxu0 0.0
  %187 = vmatpush.msra.mxu0 0.0
  %188 = vmatpush.msra.mxu0 0.0
  %189 = vmatpush.msra.mxu0 0.0
  %190 = vmatpush.msra.mxu0 0.0
  %191 = vmatpush.msra.mxu0 0.0
  %192 = vmatpush.msra.mxu0 0.0
  %193 = vmatpush.msra.mxu0 0.0
  %194 = vmatpush.msra.mxu0 %v29
  %195 = vmatpush.msra.mxu0 %v27
  %196 = vmatpush.msra.mxu0 %v25
  %197 = vmatpush.msra.mxu0 %v23
  %198 = vmatpush.msra.mxu0 %v21
  %199 = vmatpush.msra.mxu0 %v19
  %200 = vmatpush.msra.mxu0 %v17
  %201 = vmatpush.msra.mxu0 %v15
  %202 = vmatmul.f32.gmra.mxu0 %v164
  %v203 = vpop.f32.mrf.mxu0
  %v204 = vadd.f32 0.0, %v203
  %205 = vdwg.mxu0
  %v206 = vadd.f32 %v159, %v184
  %v207 = vadd.f32 %v160, %v204
  %v208 = vtanh.pop %v206
  %v209 = vtanh.pop %v207
  %v210 = vmul.f32 %v208, 0.5
  %v211 = vadd.f32 %v210, 0.5
  %v212 = vmul.f32 %v209, 0.5
  %v213 = vadd.f32 %v212, 0.5
  %v214 = vmul.f32 %v211, %v155
  %v215 = vmul.f32 %v211, %v209
  %217 = vrot.lane.b32.xlu0 %v215, 64
  %v218 = vpop.permute.xlu0 %217
  %v220 = vadd.f32 %v214, %v218
  %v221 = vtanh.pop %v220
  %v222 = vmul.f32 %v213, %v221
  %s223 = scalar_lea.vmem %s0, 48
  %v224 = vld [vmem:[%s223] sm:$0xff]
  %v225 = vld [vmem:[%s223 + $0x8] sm:$0xff]
  %227 = vrot.lane.b32.xlu0 %v222, 64
  %v228 = vpop.permute.xlu0 %227
  %v229 = vsel %vm32, %v228, 0
  %231 = vmatpush.msra.mxu0 0.0
  %232 = vmatpush.msra.mxu0 0.0
  %233 = vmatpush.msra.mxu0 0.0
  %234 = vmatpush.msra.mxu0 0.0
  %235 = vmatpush.msra.mxu0 0.0
  %236 = vmatpush.msra.mxu0 0.0
  %237 = vmatpush.msra.mxu0 0.0
  %238 = vmatpush.msra.mxu0 0.0
  %239 = vmatpush.msra.mxu0 %v28
  %240 = vmatpush.msra.mxu0 %v26
  %241 = vmatpush.msra.mxu0 %v24
  %242 = vmatpush.msra.mxu0 %v22
  %243 = vmatpush.msra.mxu0 %v20
  %244 = vmatpush.msra.mxu0 %v18
  %245 = vmatpush.msra.mxu0 %v16
  %246 = vmatpush.msra.mxu0 %v14
  %247 = vmatmul.f32.gmra.mxu0 %v229
  %v248 = vpop.f32.mrf.mxu0
  %v249 = vadd.f32 0.0, %v248
  %250 = vdwg.mxu0
  %251 = vmatpush.msra.mxu0 0.0
  %252 = vmatpush.msra.mxu0 0.0
  %253 = vmatpush.msra.mxu0 0.0
  %254 = vmatpush.msra.mxu0 0.0
  %255 = vmatpush.msra.mxu0 0.0
  %256 = vmatpush.msra.mxu0 0.0
  %257 = vmatpush.msra.mxu0 0.0
  %258 = vmatpush.msra.mxu0 0.0
  %259 = vmatpush.msra.mxu0 %v29
  %260 = vmatpush.msra.mxu0 %v27
  %261 = vmatpush.msra.mxu0 %v25
  %262 = vmatpush.msra.mxu0 %v23
  %263 = vmatpush.msra.mxu0 %v21
  %264 = vmatpush.msra.mxu0 %v19
  %265 = vmatpush.msra.mxu0 %v17
  %266 = vmatpush.msra.mxu0 %v15
  %267 = vmatmul.f32.gmra.mxu0 %v229
  %v268 = vpop.f32.mrf.mxu0
  %v269 = vadd.f32 0.0, %v268
  %270 = vdwg.mxu0
  %v271 = vadd.f32 %v224, %v249
  %v272 = vadd.f32 %v225, %v269
  %v273 = vtanh.pop %v271
  %v274 = vtanh.pop %v272
  %v275 = vmul.f32 %v273, 0.5
  %v276 = vadd.f32 %v275, 0.5
  %v277 = vmul.f32 %v274, 0.5
  %v278 = vadd.f32 %v277, 0.5
  %v279 = vmul.f32 %v276, %v220
  %v280 = vmul.f32 %v276, %v274
  %282 = vrot.lane.b32.xlu0 %v280, 64
  %v283 = vpop.permute.xlu0 %282
  %v285 = vadd.f32 %v279, %v283
  %v286 = vtanh.pop %v285
  %v287 = vmul.f32 %v278, %v286
  %s288 = scalar_lea.vmem %s0, 64
  %v289 = vld [vmem:[%s288] sm:$0xff]
  %v290 = vld [vmem:[%s288 + $0x8] sm:$0xff]
  %292 = vrot.lane.b32.xlu0 %v287, 64
  %v293 = vpop.permute.xlu0 %292
  %v294 = vsel %vm32, %v293, 0
  %296 = vmatpush.msra.mxu0 0.0
  %297 = vmatpush.msra.mxu0 0.0
  %298 = vmatpush.msra.mxu0 0.0
  %299 = vmatpush.msra.mxu0 0.0
  %300 = vmatpush.msra.mxu0 0.0
  %301 = vmatpush.msra.mxu0 0.0
  %302 = vmatpush.msra.mxu0 0.0
  %303 = vmatpush.msra.mxu0 0.0
  %304 = vmatpush.msra.mxu0 %v28
  %305 = vmatpush.msra.mxu0 %v26
  %306 = vmatpush.msra.mxu0 %v24
  %307 = vmatpush.msra.mxu0 %v22
  %308 = vmatpush.msra.mxu0 %v20
  %309 = vmatpush.msra.mxu0 %v18
  %310 = vmatpush.msra.mxu0 %v16
  %311 = vmatpush.msra.mxu0 %v14
  %312 = vmatmul.f32.gmra.mxu0 %v294
  %v313 = vpop.f32.mrf.mxu0
  %v314 = vadd.f32 0.0, %v313
  %315 = vdwg.mxu0
  %316 = vmatpush.msra.mxu0 0.0
  %317 = vmatpush.msra.mxu0 0.0
  %318 = vmatpush.msra.mxu0 0.0
  %319 = vmatpush.msra.mxu0 0.0
  %320 = vmatpush.msra.mxu0 0.0
  %321 = vmatpush.msra.mxu0 0.0
  %322 = vmatpush.msra.mxu0 0.0
  %323 = vmatpush.msra.mxu0 0.0
  %324 = vmatpush.msra.mxu0 %v29
  %325 = vmatpush.msra.mxu0 %v27
  %326 = vmatpush.msra.mxu0 %v25
  %327 = vmatpush.msra.mxu0 %v23
  %328 = vmatpush.msra.mxu0 %v21
  %329 = vmatpush.msra.mxu0 %v19
  %330 = vmatpush.msra.mxu0 %v17
  %331 = vmatpush.msra.mxu0 %v15
  %332 = vmatmul.f32.gmra.mxu0 %v294
  %v333 = vpop.f32.mrf.mxu0
  %v334 = vadd.f32 0.0, %v333
  %335 = vdwg.mxu0
  %v336 = vadd.f32 %v289, %v314
  %v337 = vadd.f32 %v290, %v334
  %v338 = vtanh.pop %v336
  %v339 = vtanh.pop %v337
  %v340 = vmul.f32 %v338, 0.5
  %v341 = vadd.f32 %v340, 0.5
  %v342 = vmul.f32 %v339, 0.5
  %v343 = vadd.f32 %v342, 0.5
  %v344 = vmul.f32 %v341, %v285
  %v345 = vmul.f32 %v341, %v339
  %347 = vrot.lane.b32.xlu0 %v345, 64
  %v348 = vpop.permute.xlu0 %347
  %v350 = vadd.f32 %v344, %v348
  %v351 = vtanh.pop %v350
  %v352 = vmul.f32 %v343, %v351
  %s353 = scalar_lea.vmem %s0, 80
  %v354 = vld [vmem:[%s353] sm:$0xff]
  %v355 = vld [vmem:[%s353 + $0x8] sm:$0xff]
  %357 = vrot.lane.b32.xlu0 %v352, 64
  %v358 = vpop.permute.xlu0 %357
  %v359 = vsel %vm32, %v358, 0
  %361 = vmatpush.msra.mxu0 0.0
  %362 = vmatpush.msra.mxu0 0.0
  %363 = vmatpush.msra.mxu0 0.0
  %364 = vmatpush.msra.mxu0 0.0
  %365 = vmatpush.msra.mxu0 0.0
  %366 = vmatpush.msra.mxu0 0.0
  %367 = vmatpush.msra.mxu0 0.0
  %368 = vmatpush.msra.mxu0 0.0
  %369 = vmatpush.msra.mxu0 %v28
  %370 = vmatpush.msra.mxu0 %v26
  %371 = vmatpush.msra.mxu0 %v24
  %372 = vmatpush.msra.mxu0 %v22
  %373 = vmatpush.msra.mxu0 %v20
  %374 = vmatpush.msra.mxu0 %v18
  %375 = vmatpush.msra.mxu0 %v16
  %376 = vmatpush.msra.mxu0 %v14
  %377 = vmatmul.f32.gmra.mxu0 %v359
  %v378 = vpop.f32.mrf.mxu0
  %v379 = vadd.f32 0.0, %v378
  %380 = vdwg.mxu0
  %381 = vmatpush.msra.mxu0 0.0
  %382 = vmatpush.msra.mxu0 0.0
  %383 = vmatpush.msra.mxu0 0.0
  %384 = vmatpush.msra.mxu0 0.0
  %385 = vmatpush.msra.mxu0 0.0
  %386 = vmatpush.msra.mxu0 0.0
  %387 = vmatpush.msra.mxu0 0.0
  %388 = vmatpush.msra.mxu0 0.0
  %389 = vmatpush.msra.mxu0 %v29
  %390 = vmatpush.msra.mxu0 %v27
  %391 = vmatpush.msra.mxu0 %v25
  %392 = vmatpush.msra.mxu0 %v23
  %393 = vmatpush.msra.mxu0 %v21
  %394 = vmatpush.msra.mxu0 %v19
  %395 = vmatpush.msra.mxu0 %v17
  %396 = vmatpush.msra.mxu0 %v15
  %397 = vmatmul.f32.gmra.mxu0 %v359
  %v398 = vpop.f32.mrf.mxu0
  %v399 = vadd.f32 0.0, %v398
  %400 = vdwg.mxu0
  %v401 = vadd.f32 %v354, %v379
  %v402 = vadd.f32 %v355, %v399
  %v403 = vtanh.pop %v401
  %v404 = vtanh.pop %v402
  %v405 = vmul.f32 %v403, 0.5
  %v406 = vadd.f32 %v405, 0.5
  %v407 = vmul.f32 %v404, 0.5
  %v408 = vadd.f32 %v407, 0.5
  %v409 = vmul.f32 %v406, %v350
  %v410 = vmul.f32 %v406, %v404
  %412 = vrot.lane.b32.xlu0 %v410, 64
  %v413 = vpop.permute.xlu0 %412
  %v415 = vadd.f32 %v409, %v413
  %v416 = vtanh.pop %v415
  %v417 = vmul.f32 %v408, %v416
  %s418 = scalar_lea.vmem %s0, 96
  %v419 = vld [vmem:[%s418] sm:$0xff]
  %v420 = vld [vmem:[%s418 + $0x8] sm:$0xff]
  %422 = vrot.lane.b32.xlu0 %v417, 64
  %v423 = vpop.permute.xlu0 %422
  %v424 = vsel %vm32, %v423, 0
  %426 = vmatpush.msra.mxu0 0.0
  %427 = vmatpush.msra.mxu0 0.0
  %428 = vmatpush.msra.mxu0 0.0
  %429 = vmatpush.msra.mxu0 0.0
  %430 = vmatpush.msra.mxu0 0.0
  %431 = vmatpush.msra.mxu0 0.0
  %432 = vmatpush.msra.mxu0 0.0
  %433 = vmatpush.msra.mxu0 0.0
  %434 = vmatpush.msra.mxu0 %v28
  %435 = vmatpush.msra.mxu0 %v26
  %436 = vmatpush.msra.mxu0 %v24
  %437 = vmatpush.msra.mxu0 %v22
  %438 = vmatpush.msra.mxu0 %v20
  %439 = vmatpush.msra.mxu0 %v18
  %440 = vmatpush.msra.mxu0 %v16
  %441 = vmatpush.msra.mxu0 %v14
  %442 = vmatmul.f32.gmra.mxu0 %v424
  %v443 = vpop.f32.mrf.mxu0
  %v444 = vadd.f32 0.0, %v443
  %445 = vdwg.mxu0
  %446 = vmatpush.msra.mxu0 0.0
  %447 = vmatpush.msra.mxu0 0.0
  %448 = vmatpush.msra.mxu0 0.0
  %449 = vmatpush.msra.mxu0 0.0
  %450 = vmatpush.msra.mxu0 0.0
  %451 = vmatpush.msra.mxu0 0.0
  %452 = vmatpush.msra.mxu0 0.0
  %453 = vmatpush.msra.mxu0 0.0
  %454 = vmatpush.msra.mxu0 %v29
  %455 = vmatpush.msra.mxu0 %v27
  %456 = vmatpush.msra.mxu0 %v25
  %457 = vmatpush.msra.mxu0 %v23
  %458 = vmatpush.msra.mxu0 %v21
  %459 = vmatpush.msra.mxu0 %v19
  %460 = vmatpush.msra.mxu0 %v17
  %461 = vmatpush.msra.mxu0 %v15
  %462 = vmatmul.f32.gmra.mxu0 %v424
  %v463 = vpop.f32.mrf.mxu0
  %v464 = vadd.f32 0.0, %v463
  %465 = vdwg.mxu0
  %v466 = vadd.f32 %v419, %v444
  %v467 = vadd.f32 %v420, %v464
  %v468 = vtanh.pop %v466
  %v469 = vtanh.pop %v467
  %v470 = vmul.f32 %v468, 0.5
  %v471 = vadd.f32 %v470, 0.5
  %v472 = vmul.f32 %v469, 0.5
  %v473 = vadd.f32 %v472, 0.5
  %v474 = vmul.f32 %v471, %v415
  %v475 = vmul.f32 %v471, %v469
  %477 = vrot.lane.b32.xlu0 %v475, 64
  %v478 = vpop.permute.xlu0 %477
  %v480 = vadd.f32 %v474, %v478
  %v481 = vtanh.pop %v480
  %v482 = vmul.f32 %v473, %v481
  %s483 = scalar_lea.vmem %s0, 112
  %v484 = vld [vmem:[%s483] sm:$0xff]
  %v485 = vld [vmem:[%s483 + $0x8] sm:$0xff]
  %487 = vrot.lane.b32.xlu0 %v482, 64
  %v488 = vpop.permute.xlu0 %487
  %v489 = vsel %vm32, %v488, 0
  %491 = vmatpush.msra.mxu0 0.0
  %492 = vmatpush.msra.mxu0 0.0
  %493 = vmatpush.msra.mxu0 0.0
  %494 = vmatpush.msra.mxu0 0.0
  %495 = vmatpush.msra.mxu0 0.0
  %496 = vmatpush.msra.mxu0 0.0
  %497 = vmatpush.msra.mxu0 0.0
  %498 = vmatpush.msra.mxu0 0.0
  %499 = vmatpush.msra.mxu0 %v28
  %500 = vmatpush.msra.mxu0 %v26
  %501 = vmatpush.msra.mxu0 %v24
  %502 = vmatpush.msra.mxu0 %v22
  %503 = vmatpush.msra.mxu0 %v20
  %504 = vmatpush.msra.mxu0 %v18
  %505 = vmatpush.msra.mxu0 %v16
  %506 = vmatpush.msra.mxu0 %v14
  %507 = vmatmul.f32.gmra.mxu0 %v489
  %v508 = vpop.f32.mrf.mxu0
  %v509 = vadd.f32 0.0, %v508
  %510 = vdwg.mxu0
  %511 = vmatpush.msra.mxu0 0.0
  %512 = vmatpush.msra.mxu0 0.0
  %513 = vmatpush.msra.mxu0 0.0
  %514 = vmatpush.msra.mxu0 0.0
  %515 = vmatpush.msra.mxu0 0.0
  %516 = vmatpush.msra.mxu0 0.0
  %517 = vmatpush.msra.mxu0 0.0
  %518 = vmatpush.msra.mxu0 0.0
  %519 = vmatpush.msra.mxu0 %v29
  %520 = vmatpush.msra.mxu0 %v27
  %521 = vmatpush.msra.mxu0 %v25
  %522 = vmatpush.msra.mxu0 %v23
  %523 = vmatpush.msra.mxu0 %v21
  %524 = vmatpush.msra.mxu0 %v19
  %525 = vmatpush.msra.mxu0 %v17
  %526 = vmatpush.msra.mxu0 %v15
  %527 = vmatmul.f32.gmra.mxu0 %v489
  %v528 = vpop.f32.mrf.mxu0
  %v529 = vadd.f32 0.0, %v528
  %530 = vdwg.mxu0
  %v531 = vadd.f32 %v484, %v509
  %v532 = vadd.f32 %v485, %v529
  %v533 = vtanh.pop %v531
  %v534 = vtanh.pop %v532
  %v535 = vmul.f32 %v533, 0.5
  %v536 = vadd.f32 %v535, 0.5
  %v537 = vmul.f32 %v534, 0.5
  %v538 = vadd.f32 %v537, 0.5
  %v539 = vmul.f32 %v536, %v480
  %v540 = vmul.f32 %v536, %v534
  %542 = vrot.lane.b32.xlu0 %v540, 64
  %v543 = vpop.permute.xlu0 %542
  %v545 = vadd.f32 %v539, %v543
  %v546 = vtanh.pop %v545
  %v547 = vmul.f32 %v538, %v546
  %v548 = vld [vmem:[%s1 + $0x10] sm:$0xff]
  %v549 = vld [vmem:[%s1 + $0x28] sm:$0xff]
  %v550 = vld [vmem:[%s1 + $0x40] sm:$0xff]
  %v551 = vld [vmem:[%s1 + $0x58] sm:$0xff]
  %v552 = vld [vmem:[%s1 + $0x70] sm:$0xff]
  %v553 = vld [vmem:[%s1 + $0x88] sm:$0xff]
  %v554 = vld [vmem:[%s1 + $0xa0] sm:$0xff]
  %v555 = vld [vmem:[%s1 + $0xb8] sm:$0xff]
  %557 = vrot.lane.b32.xlu0 %v547, 64
  %v558 = vpop.permute.xlu0 %557
  %v559 = vsel %vm32, %v558, 0
  %561 = vmatpush.msra.mxu0 0.0
  %562 = vmatpush.msra.mxu0 0.0
  %563 = vmatpush.msra.mxu0 0.0
  %564 = vmatpush.msra.mxu0 0.0
  %565 = vmatpush.msra.mxu0 0.0
  %566 = vmatpush.msra.mxu0 0.0
  %567 = vmatpush.msra.mxu0 0.0
  %568 = vmatpush.msra.mxu0 0.0
  %569 = vmatpush.msra.mxu0 %v555
  %570 = vmatpush.msra.mxu0 %v554
  %571 = vmatpush.msra.mxu0 %v553
  %572 = vmatpush.msra.mxu0 %v552
  %573 = vmatpush.msra.mxu0 %v551
  %574 = vmatpush.msra.mxu0 %v550
  %575 = vmatpush.msra.mxu0 %v549
  %576 = vmatpush.msra.mxu0 %v548
  %577 = vmatmul.f32.gmra.mxu0 %v559
  %v578 = vpop.f32.mrf.mxu0
  %v579 = vadd.f32 0.0, %v578
  %580 = vdwg.mxu0
  %v581 = vld [vmem:[%s2] sm:$0xff]
  %583 = vset.pattern.permute.xlu0 0
  %584 = vperm.xlu0 %583, %v579
  %v585 = vpop.permute.xlu0 %584
  %v587 = vadd.f32 %v581, %v585
  %vm588 = vcmask 64512
  %v589 = vsel %vm588, %v587, -inf
  %v590 = vrot.slane %v589, 4
  %v591 = vmax.f32 %v589, %v590
  %v592 = vrot.slane %v591, 2
  %v593 = vmax.f32 %v591, %v592
  %v594 = vrot.slane %v593, 1
  %v595 = vmax.f32 %v593, %v594
  %v596 = vsub.f32 %v587, %v595
  %v597 = vmul.f32 %v596, 1.442695
  %v598 = vpow.pop %v597
  %v599 = vsel %vm588, %v598, 0.0
  %v600 = vrot.slane %v599, 4
  %v601 = vadd.f32 %v599, %v600
  %v602 = vrot.slane %v601, 2
  %v603 = vadd.f32 %v601, %v602
  %v604 = vrot.slane %v603, 1
  %v605 = vadd.f32 %v603, %v604
  %v606 = vrcp.pop %v605
  %v607 = vmul.f32 %v598, %v606
  %608 = vrot.lane.b32.xlu0 %v579, 126
  %v609 = vpop.permute.xlu0 %608
  %v612 = vsel %vm588, %v607, 0
  %614 = vmatpush.msra.mxu0 0.0
  %615 = vmatpush.msra.mxu0 0.0
  %616 = vmatpush.msra.mxu0 0.0
  %617 = vmatpush.msra.mxu0 0.0
  %618 = vmatpush.msra.mxu0 0.0
  %619 = vmatpush.msra.mxu0 0.0
  %620 = vmatpush.msra.mxu0 0.0
  %621 = vmatpush.msra.mxu0 0.0
  %622 = vmatpush.msra.mxu0 0.0
  %623 = vmatpush.msra.mxu0 0.0
  %624 = vmatpush.msra.mxu0 0.0
  %625 = vmatpush.msra.mxu0 0.0
  %626 = vmatpush.msra.mxu0 0.0
  %627 = vmatpush.msra.mxu0 0.0
  %628 = vmatpush.msra.mxu0 0.0
  %629 = vmatpush.msra.mxu0 %v609
  %630 = vmatmul.f32.gmra.mxu0 %v612
  %v631 = vpop.f32.mrf.mxu0
  %v632 = vadd.f32 0.0, %v631
  %633 = vdwg.mxu0
  %634 = vrot.lane.b32.xlu0 %v579, 7
  %v635 = vpop.permute.xlu0 %634
  %v637 = vadd.f32 %v581, %v635
  %639 = vrot.lane.b32.xlu0 %v632, 8
  %v640 = vpop.permute.xlu0 %639
  %v642 = vadd.f32 %v637, %v640
  %644 = vrot.lane.b32.xlu0 %v642, 120
  %v645 = vpop.permute.xlu0 %644
  %vm647 = vcmask 7168
  %648 = vst.msk [vmem:[%s3] sm:$0xff] %vm647, %v645
  // Predicated region
  $region14: #{relation_lstm_forward.1} parent=0 // pred_check
    _
  $region15: #{relation_lstm_forward.1} parent=0 // pred_check_branch
    %650 = sbr.rel (0) target = $region17
  $region16: #{relation_lstm_forward.1} parent=0 // pred_region
    _
  $region17: #{relation_lstm_forward.1} parent=0 // pred_fallthru
    _
  // Predicated region
  $region18: #{relation_lstm_forward.1} parent=0 // pred_check
    _
  $region19: #{relation_lstm_forward.1} parent=0 // pred_check_branch
    %652 = sbr.rel (0) target = $region21
  $region20: #{relation_lstm_forward.1} parent=0 // pred_region
    _
  $region21: #{relation_lstm_forward.1} parent=0 // pred_fallthru
    _

</llo_original>
